<compile_context>
chip_gen: v7x
topology: tpu7x:2x2x1
jax: 0.10.0
libtpu: 0.0.40
codegen_flags: <defaults>
</compile_context>

<pallas_src>
import math
import functools

import jax
import jax.numpy as jnp
from jax import lax
from jax.experimental import pallas as pl
from jax.experimental.pallas import tpu as pltpu


_NEG_INF = -1e30
_VMEM_FLOOR = 32 << 20   # never request below the default scoped limit
_VMEM_CEIL = 64 << 20    # never above v7x's physical per-core VMEM


def _sublane_align(dtype):
    """Sublane packing for the second-to-last dim: 8 (f32), 16 (bf16), 32 (i8/fp8)."""
    return {4: 8, 2: 16, 1: 32}.get(jnp.dtype(dtype).itemsize, 8)


def _pick_tile(dim, preferred, align):
    """Largest `align`-aligned divisor of `dim` that is <= `preferred`.
    Falls back to the full dim, which is always a legal block extent."""
    if dim <= preferred:
        return dim
    t = (preferred // align) * align
    while t >= align:
        if dim % t == 0:
            return t
        t -= align
    return dim


def _vmem_limit(nbytes):
    return int(min(max(nbytes, _VMEM_FLOOR), _VMEM_CEIL))


# ----------------------------------------------------------------------------
# Kernel 1: linear  y = x @ W_T + b
# ----------------------------------------------------------------------------
def _linear_nok_kernel(x_ref, w_ref, b_ref, o_ref):
    # Whole contraction dim in one block: no scratch, no init/finalize.
    acc = jnp.dot(x_ref[...], w_ref[...], preferred_element_type=jnp.float32)
    o_ref[...] = (acc + b_ref[...]).astype(o_ref.dtype)


def _linear_kernel(x_ref, w_ref, b_ref, o_ref, acc_ref):
    kk = pl.program_id(2)

    @pl.when(kk == 0)
    def _init():
        acc_ref[...] = jnp.zeros(acc_ref.shape, acc_ref.dtype)

    # Native-dtype MXU operands, f32 accumulation.
    acc_ref[...] += jnp.dot(x_ref[...], w_ref[...],
                            preferred_element_type=jnp.float32)

    @pl.when(kk == pl.num_programs(2) - 1)
    def _finalize():
        o_ref[...] = (acc_ref[...] + b_ref[...]).astype(o_ref.dtype)


def linear_pallas(x, w_t, bias, *, tm=512, tn=512, tk=512):
    """x: [M, Din], w_t: [Din, Dout] (pre-transposed), bias: [Dout] -> [M, Dout]."""
    M, Din = x.shape
    Dout = w_t.shape[1]
    dt_bytes = jnp.dtype(x.dtype).itemsize
    tm = _pick_tile(M, tm, _sublane_align(x.dtype))
    tn = _pick_tile(Dout, tn, 128)
    bias2d = bias.reshape(1, Dout).astype(jnp.float32)

    # Typical d_model fits a single contraction block -> drop the K grid axis.
    single_k_limit = 4096 if dt_bytes <= 2 else 2048
    if Din <= single_k_limit:
        grid = (M // tm, Dout // tn)
        est = 2 * dt_bytes * (tm * Din + Din * tn + tm * tn) + 8 * tn + (2 << 20)
        return pl.pallas_call(
            _linear_nok_kernel,
            out_shape=jax.ShapeDtypeStruct((M, Dout), x.dtype),
            grid_spec=pltpu.PrefetchScalarGridSpec(
                num_scalar_prefetch=0,
                grid=grid,
                in_specs=[
                    pl.BlockSpec((tm, Din), lambda i, j: (i, 0)),
                    pl.BlockSpec((Din, tn), lambda i, j: (0, j)),
                    pl.BlockSpec((1, tn), lambda i, j: (0, j)),
                ],
                out_specs=pl.BlockSpec((tm, tn), lambda i, j: (i, j)),
            ),
            compiler_params=pltpu.CompilerParams(
                dimension_semantics=("parallel", "parallel"),
                vmem_limit_bytes=_vmem_limit(est)),
        )(x, w_t, bias2d)

    tk = _pick_tile(Din, tk, 128)
    grid = (M // tm, Dout // tn, Din // tk)
    est = (2 * dt_bytes * (tm * tk + tk * tn + tm * tn)
           + 4 * tm * tn + 8 * tn + (2 << 20))
    return pl.pallas_call(
        _linear_kernel,
        out_shape=jax.ShapeDtypeStruct((M, Dout), x.dtype),
        grid_spec=pltpu.PrefetchScalarGridSpec(
            num_scalar_prefetch=0,
            grid=grid,
            in_specs=[
                pl.BlockSpec((tm, tk), lambda i, j, k: (i, k)),
                pl.BlockSpec((tk, tn), lambda i, j, k: (k, j)),
                pl.BlockSpec((1, tn), lambda i, j, k: (0, j)),
            ],
            out_specs=pl.BlockSpec((tm, tn), lambda i, j, k: (i, j)),
            scratch_shapes=[pltpu.VMEM((tm, tn), jnp.float32)],
        ),
        compiler_params=pltpu.CompilerParams(
            dimension_semantics=("parallel", "parallel", "arbitrary"),
            vmem_limit_bytes=_vmem_limit(est)),
    )(x, w_t, bias2d)


# ----------------------------------------------------------------------------
# Kernel 2: flash-style multi-head attention (heads kept folded in D)
#   out[b, q_tile] = softmax(Q K^T / sqrt(d_model)) V
#   (the 1/sqrt(d_model) scale is pre-folded into W_Q / b_Q)
# ----------------------------------------------------------------------------
def _flash_mha_kernel(q_ref, k_ref, v_ref, o_ref, m_sc, l_sc, acc_sc,
                      *, num_heads):
    kv_idx = pl.program_id(2)

    @pl.when(kv_idx == 0)
    def _init():
        m_sc[...] = jnp.full(m_sc.shape, _NEG_INF, m_sc.dtype)
        l_sc[...] = jnp.zeros(l_sc.shape, l_sc.dtype)
        acc_sc[...] = jnp.zeros(acc_sc.shape, acc_sc.dtype)

    q = q_ref[0]                            # (tq, D)  native dtype (MXU input)
    k = k_ref[0]                            # (tkv, D)
    v = v_ref[0]                            # (tkv, D)

    d_model = q.shape[-1]
    d_k = d_model // num_heads

    # Static unrolled head loop; each head's update is written straight into
    # its scratch slice (no list-accumulate + concatenate per kv step).
    # NOTE: per-head QK^T contraction depth is d_k, so d_k < 128/256 leaves
    # the MXU partially fed on v6e/v7x — an algorithmic property of folded heads.
    for h in range(num_heads):
        cs = slice(h * d_k, (h + 1) * d_k)
        q_h, k_h, v_h = q[:, cs], k[:, cs], v[:, cs]
        # scores = q_h @ k_h^T (contract last dims), f32 accumulate on the MXU.
        s = lax.dot_general(q_h, k_h, (((1,), (1,)), ((), ())),
                            preferred_element_type=jnp.float32)   # (tq, tkv)
        m_prev = m_sc[:, h:h + 1]
        m_new = jnp.maximum(m_prev, jnp.max(s, axis=-1, keepdims=True))
        alpha = jnp.exp(m_prev - m_new)                            # EUP
        p = jnp.exp(s - m_new)                                     # (tq, tkv) f32
        l_sc[:, h:h + 1] = alpha * l_sc[:, h:h + 1] + jnp.sum(p, axis=-1,
                                                              keepdims=True)
        acc_sc[:, cs] = alpha * acc_sc[:, cs] + jnp.dot(
            p.astype(v_h.dtype), v_h, preferred_element_type=jnp.float32)
        m_sc[:, h:h + 1] = m_new

    @pl.when(kv_idx == pl.num_programs(2) - 1)
    def _finalize():
        inv_l = pl.reciprocal(l_sc[...], approx=True)              # (tq, H)  EUP
        acc = acc_sc[...]                                          # (tq, D)
        out_cols = [acc[:, h * d_k:(h + 1) * d_k] * inv_l[:, h:h + 1]
                    for h in range(num_heads)]
        # One lane-dense (tq, D) store, already in the fused [B, S, D] layout.
        o_ref[0] = jnp.concatenate(out_cols, axis=-1).astype(o_ref.dtype)


def attention_pallas(q_arr, k_arr, v_arr, *, num_heads, d_model,
                     col_blocks=(0, 0, 0), tq=512, tkv=512):
    """q/k/v arrays: [B, S, d_model] (or the fused [B, S, 3*d_model] passed 3x
    with col_blocks=(0,1,2)).  Returns fused attention output [B, S, d_model]."""
    B, S = q_arr.shape[0], q_arr.shape[1]
    D = d_model
    align = _sublane_align(q_arr.dtype)
    tq = _pick_tile(S, tq, align)
    tkv = _pick_tile(S, tkv, 128)        # lane dim of the (tq, tkv) score tiles
    # v7x has 2 TensorCores: make sure there are >= 2 parallel grid iterations.
    while (B * (S // tq) < 2 and tq > align and tq % 2 == 0
           and (tq // 2) % align == 0 and S % (tq // 2) == 0):
        tq //= 2
    cq, ck, cv = col_blocks
    dt_bytes = jnp.dtype(q_arr.dtype).itemsize

    kern = functools.partial(_flash_mha_kernel, num_heads=num_heads)
    grid = (B, S // tq, S // tkv)

    est = (2 * dt_bytes * (2 * tq * D + 2 * tkv * D)        # dbl-buffered q/k/v/out
           + 4 * (tq * D + 2 * tq * num_heads)              # f32 scratch
           + (2 << 20))

    return pl.pallas_call(
        kern,
        out_shape=jax.ShapeDtypeStruct((B, S, D), q_arr.dtype),
        grid_spec=pltpu.PrefetchScalarGridSpec(
            num_scalar_prefetch=0,
            grid=grid,
            in_specs=[
                pl.BlockSpec((1, tq, D), lambda b, qi, ki, c=cq: (b, qi, c)),
                pl.BlockSpec((1, tkv, D), lambda b, qi, ki, c=ck: (b, ki, c)),
                pl.BlockSpec((1, tkv, D), lambda b, qi, ki, c=cv: (b, ki, c)),
            ],
            out_specs=pl.BlockSpec((1, tq, D), lambda b, qi, ki: (b, qi, 0)),
            scratch_shapes=[
                pltpu.VMEM((tq, num_heads), jnp.float32),   # running max  m
                pltpu.VMEM((tq, num_heads), jnp.float32),   # running sum  l
                pltpu.VMEM((tq, D), jnp.float32),           # running acc
            ],
        ),
        compiler_params=pltpu.CompilerParams(
            dimension_semantics=("parallel", "parallel", "arbitrary"),
            vmem_limit_bytes=_vmem_limit(est)),
    )(q_arr, k_arr, v_arr)


# ----------------------------------------------------------------------------
# MultiHeadAttention forward (thin glue; no transposes, no extra HBM passes)
# ----------------------------------------------------------------------------
def multi_head_attention(kparams, Q, K, V, num_heads, mask=None,
                         compute_dtype=None):
    assert mask is None  # TODO(synk): decoder mask (mask != None) path not implemented
    self_attn = (Q is K) and (K is V)
    if compute_dtype is not None and Q.dtype != compute_dtype:
        Q = Q.astype(compute_dtype)
        K = Q if self_attn else K.astype(compute_dtype)
        V = Q if self_attn else V.astype(compute_dtype)
    B, S, D = Q.shape

    if self_attn:
        # Self-attention fast path: one fused [D, 3D] GEMM, activations read once.
        qkv = linear_pallas(Q.reshape(B * S, D), kparams["w_qkv_t"], kparams["b_qkv"])
        qkv = qkv.reshape(B, S, 3 * D)
        attn = attention_pallas(qkv, qkv, qkv, num_heads=num_heads, d_model=D,
                                col_blocks=(0, 1, 2))
    else:
        q = linear_pallas(Q.reshape(B * S, D), kparams["wq_t"], kparams["bq"]).reshape(B, S, D)
        k = linear_pallas(K.reshape(B * S, D), kparams["wk_t"], kparams["bk"]).reshape(B, S, D)
        v = linear_pallas(V.reshape(B * S, D), kparams["wv_t"], kparams["bv"]).reshape(B, S, D)
        attn = attention_pallas(q, k, v, num_heads=num_heads, d_model=D,
                                col_blocks=(0, 0, 0))

    out = linear_pallas(attn.reshape(B * S, D), kparams["wo_t"], kparams["bo"])
    return out.reshape(B, S, D)


# ----------------------------------------------------------------------------
# Parameters
# ----------------------------------------------------------------------------
def init_params(key, d_model):
    """Raw PyTorch-Linear-style params: W [out, in], b [out], U(-1/sqrt(in), 1/sqrt(in))."""
    bound = 1.0 / math.sqrt(d_model)
    keys = jax.random.split(key, 8)
    p = {}
    for i, n in enumerate("qkvo"):
        p[f"w{n}"] = jax.random.uniform(keys[2 * i], (d_model, d_model),
                                        minval=-bound, maxval=bound, dtype=jnp.float32)
        p[f"b{n}"] = jax.random.uniform(keys[2 * i + 1], (d_model,),
                                        minval=-bound, maxval=bound, dtype=jnp.float32)
    return p


def prepare_kernel_params(raw, d_model, compute_dtype=jnp.float32):
    """Pre-transpose weights (y = x @ W_T + b), fold the 1/sqrt(d_model) softmax
    scale into W_Q / b_Q, fuse Q/K/V, and cast MXU weight operands to
    `compute_dtype` (biases stay f32: they are added to the f32 accumulator)."""
    scale = 1.0 / math.sqrt(d_model)   # the PyTorch module uses d_model, not d_k
    p = {
        "wq_t": (raw["wq"].T * scale).astype(compute_dtype),
        "wk_t": raw["wk"].T.astype(compute_dtype),
        "wv_t": raw["wv"].T.astype(compute_dtype),
        "wo_t": raw["wo"].T.astype(compute_dtype),
        "bq": (raw["bq"] * scale).astype(jnp.float32),
        "bk": raw["bk"].astype(jnp.float32),
        "bv": raw["bv"].astype(jnp.float32),
        "bo": raw["bo"].astype(jnp.float32),
    }
    p["w_qkv_t"] = jnp.concatenate([p["wq_t"], p["wk_t"], p["wv_t"]], axis=1)
    p["b_qkv"] = jnp.concatenate([p["bq"], p["bk"], p["bv"]])
    return p


def reference_mha(raw, Q, K, V, num_heads):
    """Pure-JAX reference mirroring the PyTorch forward (unscaled raw params)."""
    B, S, D = Q.shape
    dk = D // num_heads

    def lin(x, w, b):
        return x @ w.T + b

    def split(x):
        return x.reshape(B, S, num_heads, dk).transpose(0, 2, 1, 3)

    q = split(lin(Q, raw["wq"], raw["bq"]))
    k = split(lin(K, raw["wk"], raw["bk"]))
    v = split(lin(V, raw["wv"], raw["bv"]))
    scores = jnp.einsum("bhqd,bhkd->bhqk", q, k) / math.sqrt(D)
    probs = jax.nn.softmax(scores, axis=-1)
    attn = jnp.einsum("bhqk,bhkd->bhqd", probs, v)
    fused = attn.transpose(0, 2, 1, 3).reshape(B, S, D)
    return lin(fused, raw["wo"], raw["bo"])


if __name__ == "__main__":
    B, S, D, H = 2, 8, 128, 4   # batch, seq_len, d_model, num_heads

    key = jax.random.PRNGKey(0)
    kp, kx, kq, kk, kv = jax.random.split(key, 5)
    raw = init_params(kp, D)
    params_f32 = prepare_kernel_params(raw, D, jnp.float32)
    params_bf16 = prepare_kernel_params(raw, D, jnp.bfloat16)

    X = jax.random.normal(kx, (B, S, D), dtype=jnp.float32)

    # 1) self-attention, f32 path (fused-QKV GEMM)
    out_self = jax.block_until_ready(multi_head_attention(params_f32, X, X, X, num_heads=H))
    ref_self = reference_mha(raw, X, X, X, num_heads=H)
    assert out_self.shape == (B, S, D)
    assert jnp.allclose(out_self, ref_self, atol=5e-3, rtol=5e-3), "self-attn mismatch"

    # 2) cross-attention, f32 path (separate projections)
    Q = jax.random.normal(kq, (B, S, D), dtype=jnp.float32)
    Kx = jax.random.normal(kk, (B, S, D), dtype=jnp.float32)
    Vx = jax.random.normal(kv, (B, S, D), dtype=jnp.float32)
    out_x = jax.block_until_ready(multi_head_attention(params_f32, Q, Kx, Vx, num_heads=H))
    ref_x = reference_mha(raw, Q, Kx, Vx, num_heads=H)
    assert jnp.allclose(out_x, ref_x, atol=5e-3, rtol=5e-3), "cross-attn mismatch"

    # 3) self-attention, bf16 MXU-operand path (perf config; looser tolerance)
    out_bf = jax.block_until_ready(
        multi_head_attention(params_bf16, X, X, X, num_heads=H,
                             compute_dtype=jnp.bfloat16))
    assert jnp.allclose(out_bf.astype(jnp.float32), ref_self,
                        atol=6e-2, rtol=6e-2), "bf16 self-attn mismatch"

    print("KERNEL_OK")
</pallas_src>

<mosaic_0001>
module attributes {stable_mosaic.version = 11 : i64} {
  func.func @_linear_nok_kernel(%arg0: i32, %arg1: i32, %arg2: memref<16x128xf32, #tpu.memory_space<vmem>>, %arg3: memref<128x384xf32, #tpu.memory_space<vmem>>, %arg4: memref<1x384xf32, #tpu.memory_space<vmem>>, %arg5: memref<16x384xf32, #tpu.memory_space<vmem>>) attributes {dimension_semantics = [#tpu.dimension_semantics<parallel>, #tpu.dimension_semantics<parallel>], iteration_bounds = array<i64: 1, 1>, scalar_prefetch = 0 : i64, scratch_operands = 0 : i64, tpu.core_type = #tpu.core_type<tc>, window_params = [{transform_indices = @transform_0, window_bounds = array<i64: 16, 128>}, {transform_indices = @transform_1, window_bounds = array<i64: 128, 384>}, {transform_indices = @transform_2, window_bounds = array<i64: 1, 384>}, {transform_indices = @transform_3, window_bounds = array<i64: 16, 384>}]} {
    %c0 = arith.constant 0 : index
    %c0_0 = arith.constant 0 : index
    %0 = vector.load %arg2[%c0, %c0_0] : memref<16x128xf32, #tpu.memory_space<vmem>>, vector<16x128xf32>
    %c0_1 = arith.constant 0 : index
    %c0_2 = arith.constant 0 : index
    %1 = vector.load %arg3[%c0_1, %c0_2] : memref<128x384xf32, #tpu.memory_space<vmem>>, vector<128x384xf32>
    %cst = arith.constant dense<0.000000e+00> : vector<16x384xf32>
    %2 = tpu.matmul %0, %1, %cst {dimension_numbers = #tpu.dot_dimension_numbers<[1], [0], [0], [1], [0, 0, 1, 1], [], []>} : vector<16x128xf32>, vector<128x384xf32>, vector<16x384xf32> -> vector<16x384xf32>
    %c0_3 = arith.constant 0 : index
    %c0_4 = arith.constant 0 : index
    %3 = vector.load %arg4[%c0_3, %c0_4] : memref<1x384xf32, #tpu.memory_space<vmem>>, vector<1x384xf32>
    %4 = vector.broadcast %3 : vector<1x384xf32> to vector<16x384xf32>
    %5 = arith.addf %2, %4 : vector<16x384xf32>
    %c0_5 = arith.constant 0 : index
    %c0_6 = arith.constant 0 : index
    %6 = vector.load %arg5[%c0_5, %c0_6] : memref<16x384xf32, #tpu.memory_space<vmem>>, vector<16x384xf32>
    tpu.vector_store %arg5[%c0_5, %c0_6], %5 {strides = array<i32>} : memref<16x384xf32, #tpu.memory_space<vmem>>, vector<16x384xf32>,
    return
  }
  func.func @transform_0(%arg0: i32, %arg1: i32) -> (i32, i32) {
    %c0_i32 = arith.constant 0 : i32
    %c0_i32_0 = arith.constant 0 : i32
    return %arg0, %c0_i32 : i32, i32
  }
  func.func @transform_1(%arg0: i32, %arg1: i32) -> (i32, i32) {
    %c0_i32 = arith.constant 0 : i32
    %c0_i32_0 = arith.constant 0 : i32
    return %c0_i32, %arg1 : i32, i32
  }
  func.func @transform_2(%arg0: i32, %arg1: i32) -> (i32, i32) {
    %c0_i32 = arith.constant 0 : i32
    %c0_i32_0 = arith.constant 0 : i32
    return %c0_i32, %arg1 : i32, i32
  }
  func.func @transform_3(%arg0: i32, %arg1: i32) -> (i32, i32) {
    %c0_i32 = arith.constant 0 : i32
    return %arg0, %arg1 : i32, i32
  }
}

</mosaic_0001>

<llo_original>
// kernel: tpu_custom_call.1
$region0: #{tpu_custom_call.1}
  #allocation0 [shape = 'u32[]', space=smem, size = 0x4, offset = 0x4, fixed_abs, tag = 'smem constant byte address 0x4 - core index']
  #allocation1 [shape = 'u32[144,128]{1,0:T(1,128)}', space=vmem, size = 0x12000, scoped, tag = 'internal scratch']
  %s0 = inlined_call_operand.hbm [shape: f32[16,128], index: 0, kind: input, shape index: {}]
  %s1 = inlined_call_operand.hbm [shape: f32[128,384], index: 1, kind: input, shape index: {}]
  %s2 = inlined_call_operand.vmem [shape: f32[1,384], index: 2, kind: input, shape index: {}]
  %s3 = inlined_call_operand.hbm [shape: f32[16,384], index: 3, kind: output, shape index: {}]
  %s4 = sld [smem:[#allocation0]]
  $region30: #{tpu_custom_call.1} parent=0
    _
  %s6 = ssub.s32 1, %s4
  %s7 = scalar_select 0, %s6, %s4
  $region1: #{tpu_custom_call.1} parent=0
    #allocation2 [shape = 'u8[8192]{0}', space=vmem, size = 0x2000, scoped, tag = 'input window, operand 0, single buffered']
    #allocation3 [shape = 's32[1]{0}', space=sflag, size = 0x4, scoped, tag = 'scoped memory for tpu_custom_call.1']
    #allocation4 [shape = 's32[1]{0}', space=sflag, size = 0x4, scoped, tag = 'scoped memory for tpu_custom_call.1']
    #allocation5 [shape = 'u8[196608]{0}', space=vmem, size = 0x30000, scoped, tag = 'input window, operand 1, single buffered']
    #allocation6 [shape = 's32[1]{0}', space=sflag, size = 0x4, scoped, tag = 'scoped memory for tpu_custom_call.1']
    #allocation7 [shape = 'u8[24576]{0}', space=vmem, size = 0x6000, scoped, tag = 'output window, operand 0, single buffered']
    %8 = vsyncpa [#allocation3], 0
    %9 = vsyncpa [#allocation6], 0
    %10 = vsyncpa [#allocation4], 0
    // Predicated region
    $region2: #{tpu_custom_call.1} parent=1 // pred_check
      _
    $region3: #{tpu_custom_call.1} parent=1 // pred_check_branch
      %12 = sbr.rel (0) target = $region5
    $region4: #{tpu_custom_call.1} parent=1 // pred_region
      %s14 = ssub.s32 256, 256
      %15 = vsyncadd [#allocation3], %s14
      %s16 = sshll.u32 [#allocation2], 4
      %s17 = int_to_ptr.vmem [resolvable:$true] %s16
      %22 = dma.hbm_to_vmem [thread:$0]  %s0, 256, %s17, [#allocation3], 128, 128, 8
    $region5: #{tpu_custom_call.1} parent=1 // pred_fallthru
      _
    // Predicated region
    $region6: #{tpu_custom_call.1} parent=1 // pred_check
      _
    $region7: #{tpu_custom_call.1} parent=1 // pred_check_branch
      %24 = sbr.rel (0) target = $region9
    $region8: #{tpu_custom_call.1} parent=1 // pred_region
      %s26 = ssub.s32 6144, 6144
      %27 = vsyncadd [#allocation6], %s26
      %s28 = sshll.u32 [#allocation5], 4
      %s29 = int_to_ptr.vmem [resolvable:$true] %s28
      %34 = dma.hbm_to_vmem [thread:$0]  %s1, 6144, %s29, [#allocation6], 384, 384, 24
    $region9: #{tpu_custom_call.1} parent=1 // pred_fallthru
      _
    // Predicated region
    $region10: #{tpu_custom_call.1} parent=1 // pred_check
      _
    $region11: #{tpu_custom_call.1} parent=1 // pred_check_branch
      %36 = sbr.rel (0) target = $region13
    $region12: #{tpu_custom_call.1} parent=1 // pred_region
      _
    $region13: #{tpu_custom_call.1} parent=1 // pred_fallthru
      _
    // Predicated region
    $region14: #{tpu_custom_call.1} parent=1 // pred_check
      _
    $region15: #{tpu_custom_call.1} parent=1 // pred_check_branch
      %38 = sbr.rel (0) target = $region17
    $region16: #{tpu_custom_call.1} parent=1 // pred_region
      %39 = dma.done [#allocation3], 256
    $region17: #{tpu_custom_call.1} parent=1 // pred_fallthru
      _
    // Predicated region
    $region18: #{tpu_custom_call.1} parent=1 // pred_check
      _
    $region19: #{tpu_custom_call.1} parent=1 // pred_check_branch
      %41 = sbr.rel (0) target = $region21
    $region20: #{tpu_custom_call.1} parent=1 // pred_region
      %42 = dma.done [#allocation6], 6144
    $region21: #{tpu_custom_call.1} parent=1 // pred_fallthru
      _
    %v43 = vld [vmem:[#allocation2] sm:$0xff]
    %v44 = vld [vmem:[#allocation2 + $0x8] sm:$0xff]
    %v45 = vld [vmem:[#allocation5] sm:$0xff]
    %v46 = vld [vmem:[#allocation5 + $0x8] sm:$0xff]
    %v47 = vld [vmem:[#allocation5 + $0x10] sm:$0xff]
    %v48 = vld [vmem:[#allocation5 + $0x18] sm:$0xff]
    %v49 = vld [vmem:[#allocation5 + $0x20] sm:$0xff]
    %v50 = vld [vmem:[#allocation5 + $0x28] sm:$0xff]
    %v51 = vld [vmem:[#allocation5 + $0x30] sm:$0xff]
    %v52 = vld [vmem:[#allocation5 + $0x38] sm:$0xff]
    %v53 = vld [vmem:[#allocation5 + $0x40] sm:$0xff]
    %v54 = vld [vmem:[#allocation5 + $0x48] sm:$0xff]
    %v55 = vld [vmem:[#allocation5 + $0x50] sm:$0xff]
    %v56 = vld [vmem:[#allocation5 + $0x58] sm:$0xff]
    %v57 = vld [vmem:[#allocation5 + $0x60] sm:$0xff]
    %v58 = vld [vmem:[#allocation5 + $0x68] sm:$0xff]
    %v59 = vld [vmem:[#allocation5 + $0x70] sm:$0xff]
    %v60 = vld [vmem:[#allocation5 + $0x78] sm:$0xff]
    %v61 = vld [vmem:[#allocation5 + $0x80] sm:$0xff]
    %v62 = vld [vmem:[#allocation5 + $0x88] sm:$0xff]
    %v63 = vld [vmem:[#allocation5 + $0x90] sm:$0xff]
    %v64 = vld [vmem:[#allocation5 + $0x98] sm:$0xff]
    %v65 = vld [vmem:[#allocation5 + $0xa0] sm:$0xff]
    %v66 = vld [vmem:[#allocation5 + $0xa8] sm:$0xff]
    %v67 = vld [vmem:[#allocation5 + $0xb0] sm:$0xff]
    %v68 = vld [vmem:[#allocation5 + $0xb8] sm:$0xff]
    %v69 = vld [vmem:[#allocation5 + $0xc0] sm:$0xff]
    %v70 = vld [vmem:[#allocation5 + $0xc8] sm:$0xff]
    %v71 = vld [vmem:[#allocation5 + $0xd0] sm:$0xff]
    %v72 = vld [vmem:[#allocation5 + $0xd8] sm:$0xff]
    %v73 = vld [vmem:[#allocation5 + $0xe0] sm:$0xff]
    %v74 = vld [vmem:[#allocation5 + $0xe8] sm:$0xff]
    %v75 = vld [vmem:[#allocation5 + $0xf0] sm:$0xff]
    %v76 = vld [vmem:[#allocation5 + $0xf8] sm:$0xff]
    %v77 = vld [vmem:[#allocation5 + $0x100] sm:$0xff]
    %v78 = vld [vmem:[#allocation5 + $0x108] sm:$0xff]
    %v79 = vld [vmem:[#allocation5 + $0x110] sm:$0xff]
    %v80 = vld [vmem:[#allocation5 + $0x118] sm:$0xff]
    %v81 = vld [vmem:[#allocation5 + $0x120] sm:$0xff]
    %v82 = vld [vmem:[#allocation5 + $0x128] sm:$0xff]
    %v83 = vld [vmem:[#allocation5 + $0x130] sm:$0xff]
    %v84 = vld [vmem:[#allocation5 + $0x138] sm:$0xff]
    %v85 = vld [vmem:[#allocation5 + $0x140] sm:$0xff]
    %v86 = vld [vmem:[#allocation5 + $0x148] sm:$0xff]
    %v87 = vld [vmem:[#allocation5 + $0x150] sm:$0xff]
    %v88 = vld [vmem:[#allocation5 + $0x158] sm:$0xff]
    %v89 = vld [vmem:[#allocation5 + $0x160] sm:$0xff]
    %v90 = vld [vmem:[#allocation5 + $0x168] sm:$0xff]
    %v91 = vld [vmem:[#allocation5 + $0x170] sm:$0xff]
    %v92 = vld [vmem:[#allocation5 + $0x178] sm:$0xff]
    %v93 = vld [vmem:[%s2] sm:$0x7]
    %v95 = vlaneseq
    %v96 = vshrl.u32 %v95, 7
    %v97 = vsub.s32 0, %v96
    %v98 = vrot.slane %v93, %v97
    %v99 = vlaneseq
    %v100 = vshrl.u32 %v99, 7
    %v101 = vsub.s32 1, %v100
    %v102 = vrot.slane %v93, %v101
    %v103 = vlaneseq
    %v104 = vshrl.u32 %v103, 7
    %v105 = vsub.s32 2, %v104
    %v106 = vrot.slane %v93, %v105
    %110 = vmatprep.subr.mxu0 %v46
    %111 = vmatpush1.msra.mxu0 %v45
    %112 = vmatprep.subr.mxu0 %v49
    %113 = vmatpush1.msra.mxu0 %v48
    %114 = vmatprep.subr.mxu0 %v52
    %115 = vmatpush1.msra.mxu0 %v51
    %116 = vmatprep.subr.mxu0 %v55
    %117 = vmatpush1.msra.mxu0 %v54
    %118 = vmatprep.subr.mxu0 %v58
    %119 = vmatpush1.msra.mxu0 %v57
    %120 = vmatprep.subr.mxu0 %v61
    %121 = vmatpush1.msra.mxu0 %v60
    %122 = vmatprep.subr.mxu0 %v64
    %123 = vmatpush1.msra.mxu0 %v63
    %124 = vmatprep.subr.mxu0 %v67
    %125 = vmatpush1.msra.mxu0 %v66
    %126 = vmatprep.subr.mxu0 %v70
    %127 = vmatpush1.msra.mxu0 %v69
    %128 = vmatprep.subr.mxu0 %v73
    %129 = vmatpush1.msra.mxu0 %v72
    %130 = vmatprep.subr.mxu0 %v76
    %131 = vmatpush1.msra.mxu0 %v75
    %132 = vmatprep.subr.mxu0 %v79
    %133 = vmatpush1.msra.mxu0 %v78
    %134 = vmatprep.subr.mxu0 %v82
    %135 = vmatpush1.msra.mxu0 %v81
    %136 = vmatprep.subr.mxu0 %v85
    %137 = vmatpush1.msra.mxu0 %v84
    %138 = vmatprep.subr.mxu0 %v88
    %139 = vmatpush1.msra.mxu0 %v87
    %140 = vmatprep.subr.mxu0 %v91
    %141 = vmatpush1.msra.mxu0 %v90
    %142 = vmatprep.subr.mxu0 0.0
    %143 = vmatpush1.msra.mxu0 0.0
    %144 = vmatprep.subr.mxu0 0.0
    %145 = vmatpush1.msra.mxu0 0.0
    %146 = vmatprep.subr.mxu0 0.0
    %147 = vmatpush1.msra.mxu0 0.0
    %148 = vmatprep.subr.mxu0 0.0
    %149 = vmatpush1.msra.mxu0 0.0
    %150 = vmatprep.subr.mxu0 0.0
    %151 = vmatpush1.msra.mxu0 0.0
    %152 = vmatprep.subr.mxu0 0.0
    %153 = vmatpush1.msra.mxu0 0.0
    %154 = vmatprep.subr.mxu0 0.0
    %155 = vmatpush1.msra.mxu0 0.0
    %156 = vmatprep.subr.mxu0 0.0
    %157 = vmatpush1.msra.mxu0 0.0
    %158 = vmatprep.subr.mxu0 0.0
    %159 = vmatpush1.msra.mxu0 0.0
    %160 = vmatprep.subr.mxu0 0.0
    %161 = vmatpush1.msra.mxu0 0.0
    %162 = vmatprep.subr.mxu0 0.0
    %163 = vmatpush1.msra.mxu0 0.0
    %164 = vmatprep.subr.mxu0 0.0
    %165 = vmatpush1.msra.mxu0 0.0
    %166 = vmatprep.subr.mxu0 0.0
    %167 = vmatpush1.msra.mxu0 0.0
    %168 = vmatprep.subr.mxu0 0.0
    %169 = vmatpush1.msra.mxu0 0.0
    %170 = vmatprep.subr.mxu0 0.0
    %171 = vmatpush1.msra.mxu0 0.0
    %172 = vmatprep.subr.mxu0 0.0
    %173 = vmatpush1.msra.mxu0 0.0
    %174 = vmatprep.mubr.f32.mxu0 0.0
    %175 = vmatmul.mubr.f32.gmra.mrb[0].mxu0 %v43
    %v176 = vpop.f32.mrb[0].mxu0
    %v177 = vadd.f32 %v98, %v176
    %v178 = vpop.f32.mrb[0].mxu0
    %v179 = vadd.f32 %v102, %v178
    %180 = vmatprep.mubr.f32.mxu0 0.0
    %181 = vmatmul.mubr.f32.gmra.mrb[0].mxu0 %v44
    %v182 = vpop.f32.mrb[0].mxu0
    %v183 = vadd.f32 %v98, %v182
    %v184 = vpop.f32.mrb[0].mxu0
    %v185 = vadd.f32 %v102, %v184
    %186 = vdwg.mxu0
    %187 = vmatprep.subr.mxu0 0.0
    %188 = vmatpush1.msra.mxu0 %v47
    %189 = vmatprep.subr.mxu0 0.0
    %190 = vmatpush1.msra.mxu0 %v50
    %191 = vmatprep.subr.mxu0 0.0
    %192 = vmatpush1.msra.mxu0 %v53
    %193 = vmatprep.subr.mxu0 0.0
    %194 = vmatpush1.msra.mxu0 %v56
    %195 = vmatprep.subr.mxu0 0.0
    %196 = vmatpush1.msra.mxu0 %v59
    %197 = vmatprep.subr.mxu0 0.0
    %198 = vmatpush1.msra.mxu0 %v62
    %199 = vmatprep.subr.mxu0 0.0
    %200 = vmatpush1.msra.mxu0 %v65
    %201 = vmatprep.subr.mxu0 0.0
    %202 = vmatpush1.msra.mxu0 %v68
    %203 = vmatprep.subr.mxu0 0.0
    %204 = vmatpush1.msra.mxu0 %v71
    %205 = vmatprep.subr.mxu0 0.0
    %206 = vmatpush1.msra.mxu0 %v74
    %207 = vmatprep.subr.mxu0 0.0
    %208 = vmatpush1.msra.mxu0 %v77
    %209 = vmatprep.subr.mxu0 0.0
    %210 = vmatpush1.msra.mxu0 %v80
    %211 = vmatprep.subr.mxu0 0.0
    %212 = vmatpush1.msra.mxu0 %v83
    %213 = vmatprep.subr.mxu0 0.0
    %214 = vmatpush1.msra.mxu0 %v86
    %215 = vmatprep.subr.mxu0 0.0
    %216 = vmatpush1.msra.mxu0 %v89
    %217 = vmatprep.subr.mxu0 0.0
    %218 = vmatpush1.msra.mxu0 %v92
    %219 = vmatprep.subr.mxu0 0.0
    %220 = vmatpush1.msra.mxu0 0.0
    %221 = vmatprep.subr.mxu0 0.0
    %222 = vmatpush1.msra.mxu0 0.0
    %223 = vmatprep.subr.mxu0 0.0
    %224 = vmatpush1.msra.mxu0 0.0
    %225 = vmatprep.subr.mxu0 0.0
    %226 = vmatpush1.msra.mxu0 0.0
    %227 = vmatprep.subr.mxu0 0.0
    %228 = vmatpush1.msra.mxu0 0.0
    %229 = vmatprep.subr.mxu0 0.0
    %230 = vmatpush1.msra.mxu0 0.0
    %231 = vmatprep.subr.mxu0 0.0
    %232 = vmatpush1.msra.mxu0 0.0
    %233 = vmatprep.subr.mxu0 0.0
    %234 = vmatpush1.msra.mxu0 0.0
    %235 = vmatprep.subr.mxu0 0.0
    %236 = vmatpush1.msra.mxu0 0.0
    %237 = vmatprep.subr.mxu0 0.0
    %238 = vmatpush1.msra.mxu0 0.0
    %239 = vmatprep.subr.mxu0 0.0
    %240 = vmatpush1.msra.mxu0 0.0
    %241 = vmatprep.subr.mxu0 0.0
    %242 = vmatpush1.msra.mxu0 0.0
    %243 = vmatprep.subr.mxu0 0.0
    %244 = vmatpush1.msra.mxu0 0.0
    %245 = vmatprep.subr.mxu0 0.0
    %246 = vmatpush1.msra.mxu0 0.0
    %247 = vmatprep.subr.mxu0 0.0
    %248 = vmatpush1.msra.mxu0 0.0
    %249 = vmatprep.subr.mxu0 0.0
    %250 = vmatpush1.msra.mxu0 0.0
    %251 = vmatprep.mubr.f32.mxu0 0.0
    %252 = vmatmul.mubr.f32.gmra.mrb[0].mxu0 %v43
    %v253 = vpop.f32.mrb[0].mxu0
    %v254 = vadd.f32 %v106, %v253
    %v255 = vpop.f32.mrb[0].mxu0
    %256 = vmatprep.mubr.f32.mxu0 0.0
    %257 = vmatmul.mubr.f32.gmra.mrb[0].mxu0 %v44
    %v258 = vpop.f32.mrb[0].mxu0
    %v259 = vadd.f32 %v106, %v258
    %v260 = vpop.f32.mrb[0].mxu0
    %261 = vdwg.mxu0
    %262 = vst [vmem:[#allocation7] sm:$0xff] %v177
    %263 = vst [vmem:[#allocation7 + $0x8] sm:$0xff] %v179
    %264 = vst [vmem:[#allocation7 + $0x10] sm:$0xff] %v254
    %265 = vst [vmem:[#allocation7 + $0x18] sm:$0xff] %v183
    %266 = vst [vmem:[#allocation7 + $0x20] sm:$0xff] %v185
    %267 = vst [vmem:[#allocation7 + $0x28] sm:$0xff] %v259
    // Predicated region
    $region22: #{tpu_custom_call.1} parent=1 // pred_check
      _
    $region23: #{tpu_custom_call.1} parent=1 // pred_check_branch
      %269 = sbr.rel (0) target = $region25
    $region24: #{tpu_custom_call.1} parent=1 // pred_region
      %s271 = ssub.s32 768, 768
      %272 = vsyncadd [#allocation4], %s271
      %s273 = sshll.u32 [#allocation7], 4
      %s274 = int_to_ptr.vmem [resolvable:$true] %s273
      %279 = dma.vmem_to_hbm [thread:$0]  %s274, 768, %s3, [#allocation4], 384, 384, 24
    $region25: #{tpu_custom_call.1} parent=1 // pred_fallthru
      _
    // Predicated region
    $region26: #{tpu_custom_call.1} parent=1 // pred_check
      _
    $region27: #{tpu_custom_call.1} parent=1 // pred_check_branch
      %281 = sbr.rel (0) target = $region29
    $region28: #{tpu_custom_call.1} parent=1 // pred_region
      %282 = dma.done [#allocation4], 768
    $region29: #{tpu_custom_call.1} parent=1 // pred_fallthru
      _
    %283 = vsyncpa [#allocation3], 1
    %284 = vsyncpa [#allocation6], 1
    %285 = vsyncpa [#allocation4], 1

</llo_original>
